<compile_context>
chip_gen: v6e
topology: v6e:2x2x1
jax: 0.10.0
libtpu: 0.0.40
codegen_flags: <defaults>
</compile_context>

<pallas_src>
import functools

import jax
import jax.numpy as jnp
from jax.experimental import pallas as pl
from jax.experimental.pallas import tpu as pltpu


def _one_to_one_kernel(x_ref, w_ref, o_ref):
    # Exactly one load-mul-store per vreg; the (1, TN) weight tile broadcasts
    # over the TM sublanes of the x tile.  No temporaries, no MXU work —
    # the op is purely HBM-bandwidth bound.
    o_ref[...] = x_ref[...] * w_ref[...]


def _round_up(v, m):
    return ((v + m - 1) // m) * m


@functools.partial(jax.jit, static_argnames=("max_block_rows", "max_block_cols"))
def one_to_one_layer(x, weights, *, max_block_rows=1024, max_block_cols=1024):
    """Pallas implementation of OneToOneLayer.forward: x * weights.

    x:       (batch, input_size)
    weights: (1, input_size)
    """
    batch, input_size = x.shape
    assert weights.shape == (1, input_size)

    out_dtype = jnp.result_type(x.dtype, weights.dtype)
    x = x.astype(out_dtype)
    weights = weights.astype(out_dtype)

    # ---- Tile-size selection (lane-dense, VMEM-aware) ----------------------
    # Sublane-align batch to 8, lane-align features to 128 so every block maps
    # to full vregs (no masked vst.msk partial stores, no 4x-padded DMA rows).
    m_pad = _round_up(batch, 8)
    n_pad = _round_up(input_size, 128)

    # Big enough to amortize the ~0.35us per-grid-step overhead, small enough
    # that double-buffered x + out tiles stay well under v7x's 32 MiB scoped
    # VMEM default (1024x1024 f32 = 4 MiB per tile -> ~16 MiB live).
    tm = min(m_pad, _round_up(max_block_rows, 8))
    tn = min(n_pad, _round_up(max_block_cols, 128))

    # Zero-pad so the grid divides evenly; padding is sliced off on return.
    m_full = _round_up(m_pad, tm)
    n_full = _round_up(n_pad, tn)
    if (m_full, n_full) != (batch, input_size):
        x = jnp.pad(x, ((0, m_full - batch), (0, n_full - input_size)))
    if n_full != input_size:
        weights = jnp.pad(weights, ((0, 0), (0, n_full - input_size)))

    # Column tiles on the outer axis, batch tiles on the inner (fastest) axis:
    # the tiny (1, tn) weight tile stays resident in VMEM across the whole
    # batch sweep and is only re-fetched when the column block changes.
    grid = (n_full // tn, m_full // tm)

    out = pl.pallas_call(
        _one_to_one_kernel,
        out_shape=jax.ShapeDtypeStruct((m_full, n_full), out_dtype),
        grid=grid,
        in_specs=[
            pl.BlockSpec((tm, tn), lambda j, i: (i, j),
                         memory_space=pltpu.MemorySpace.VMEM),
            pl.BlockSpec((1, tn), lambda j, i: (0, j),
                         memory_space=pltpu.MemorySpace.VMEM),
        ],
        out_specs=pl.BlockSpec((tm, tn), lambda j, i: (i, j),
                               memory_space=pltpu.MemorySpace.VMEM),
        compiler_params=pltpu.CompilerParams(
            # Every output tile is written exactly once -> both axes are
            # independent; lets the scheduler shard grid axes across
            # TensorCores where available (v7x).
            dimension_semantics=("parallel", "parallel")),
    )(x, weights)

    return out[:batch, :input_size]


if __name__ == "__main__":
    key = jax.random.PRNGKey(0)
    kx, kw, kx2, kw2 = jax.random.split(key, 4)

    # Shapes implied by the module: x (batch, input_size), weights (1, input_size).
    batch, input_size = 2, 32
    x = jax.random.normal(kx, (batch, input_size), dtype=jnp.float32)
    # Deterministic init mirroring torch.randn(1, input_size).
    weights = jax.random.normal(kw, (1, input_size), dtype=jnp.float32)

    out = jax.block_until_ready(one_to_one_layer(x, weights))
    ref = x * weights
    assert out.shape == (batch, input_size)
    assert out.dtype == ref.dtype
    assert jnp.allclose(out, ref, atol=1e-6, rtol=1e-6)

    # Exercise the tiled + padded path (multi-block grid on both axes).
    b2, n2 = 260, 200
    x2 = jax.random.normal(kx2, (b2, n2), dtype=jnp.float32)
    w2 = jax.random.normal(kw2, (1, n2), dtype=jnp.float32)
    out2 = jax.block_until_ready(
        one_to_one_layer(x2, w2, max_block_rows=128, max_block_cols=128))
    assert jnp.allclose(out2, x2 * w2, atol=1e-6, rtol=1e-6)

    print("KERNEL_OK")
</pallas_src>

<mosaic_0001>
module attributes {stable_mosaic.version = 11 : i64} {
  func.func @_one_to_one_kernel(%arg0: i32, %arg1: i32, %arg2: memref<8x128xf32, #tpu.memory_space<vmem>>, %arg3: memref<1x128xf32, #tpu.memory_space<vmem>>, %arg4: memref<8x128xf32, #tpu.memory_space<vmem>>) attributes {dimension_semantics = [#tpu.dimension_semantics<parallel>, #tpu.dimension_semantics<parallel>], iteration_bounds = array<i64: 1, 1>, scalar_prefetch = 0 : i64, scratch_operands = 0 : i64, tpu.core_type = #tpu.core_type<tc>, window_params = [{transform_indices = @transform_0, window_bounds = array<i64: 8, 128>}, {transform_indices = @transform_1, window_bounds = array<i64: 1, 128>}, {transform_indices = @transform_2, window_bounds = array<i64: 8, 128>}]} {
    %c0 = arith.constant 0 : index
    %c0_0 = arith.constant 0 : index
    %0 = vector.load %arg2[%c0, %c0_0] : memref<8x128xf32, #tpu.memory_space<vmem>>, vector<8x128xf32>
    %c0_1 = arith.constant 0 : index
    %c0_2 = arith.constant 0 : index
    %1 = vector.load %arg3[%c0_1, %c0_2] : memref<1x128xf32, #tpu.memory_space<vmem>>, vector<1x128xf32>
    %2 = vector.broadcast %1 : vector<1x128xf32> to vector<8x128xf32>
    %3 = arith.mulf %0, %2 : vector<8x128xf32>
    %c0_3 = arith.constant 0 : index
    %c0_4 = arith.constant 0 : index
    %4 = vector.load %arg4[%c0_3, %c0_4] : memref<8x128xf32, #tpu.memory_space<vmem>>, vector<8x128xf32>
    tpu.vector_store %arg4[%c0_3, %c0_4], %3 {strides = array<i32>} : memref<8x128xf32, #tpu.memory_space<vmem>>, vector<8x128xf32>,
    return
  }
  func.func @transform_0(%arg0: i32, %arg1: i32) -> (i32, i32) {
    %c0_i32 = arith.constant 0 : i32
    return %arg1, %arg0 : i32, i32
  }
  func.func @transform_1(%arg0: i32, %arg1: i32) -> (i32, i32) {
    %c0_i32 = arith.constant 0 : i32
    %c0_i32_0 = arith.constant 0 : i32
    return %c0_i32, %arg0 : i32, i32
  }
  func.func @transform_2(%arg0: i32, %arg1: i32) -> (i32, i32) {
    %c0_i32 = arith.constant 0 : i32
    return %arg1, %arg0 : i32, i32
  }
}

</mosaic_0001>

<llo_original>
// kernel: one_to_one_layer.1
$region0: #{one_to_one_layer.1}
  #allocation0 [shape = 'u32[]', space=smem, size = 0x4, offset = 0x4, fixed_abs, tag = 'smem constant byte address 0x4 - core index']
  #allocation1 [shape = 'u32[144,128]{1,0:T(1,128)}', space=vmem, size = 0x12000, scoped, tag = 'internal scratch']
  %s0 = inlined_call_operand.vmem [shape: f32[8,128], index: 0, kind: input, shape index: {}]
  %s1 = inlined_call_operand.vmem [shape: f32[1,128], index: 1, kind: input, shape index: {}]
  %s2 = inlined_call_operand.vmem [shape: f32[8,128], index: 2, kind: output, shape index: {}]
  %s3 = sld [smem:[#allocation0]]
  $region18: #{one_to_one_layer.1} parent=0
    _
  %s5 = ssub.s32 1, %s3
  %s6 = scalar_select 0, %s5, %s3
  // Predicated region
  $region2: #{one_to_one_layer.1} parent=0 // pred_check
    _
  $region3: #{one_to_one_layer.1} parent=0 // pred_check_branch
    %8 = sbr.rel (0) target = $region5
  $region4: #{one_to_one_layer.1} parent=0 // pred_region
    _
  $region5: #{one_to_one_layer.1} parent=0 // pred_fallthru
    _
  // Predicated region
  $region6: #{one_to_one_layer.1} parent=0 // pred_check
    _
  $region7: #{one_to_one_layer.1} parent=0 // pred_check_branch
    %10 = sbr.rel (0) target = $region9
  $region8: #{one_to_one_layer.1} parent=0 // pred_region
    _
  $region9: #{one_to_one_layer.1} parent=0 // pred_fallthru
    _
  %v11 = vld [vmem:[%s0] sm:$0xff]
  %v12 = vld [vmem:[%s1] sm:$0x1]
  %v14 = vlaneseq
  %v15 = vshrl.u32 %v14, 7
  %v16 = vsub.s32 0, %v15
  %v17 = vrot.slane %v12, %v16
  %v19 = vmul.f32 %v11, %v17
  %20 = vst [vmem:[%s2] sm:$0xff] %v19
  // Predicated region
  $region10: #{one_to_one_layer.1} parent=0 // pred_check
    _
  $region11: #{one_to_one_layer.1} parent=0 // pred_check_branch
    %22 = sbr.rel (0) target = $region13
  $region12: #{one_to_one_layer.1} parent=0 // pred_region
    _
  $region13: #{one_to_one_layer.1} parent=0 // pred_fallthru
    _
  // Predicated region
  $region14: #{one_to_one_layer.1} parent=0 // pred_check
    _
  $region15: #{one_to_one_layer.1} parent=0 // pred_check_branch
    %24 = sbr.rel (0) target = $region17
  $region16: #{one_to_one_layer.1} parent=0 // pred_region
    _
  $region17: #{one_to_one_layer.1} parent=0 // pred_fallthru
    _

</llo_original>
